<compile_context>
chip_gen: v7x
topology: tpu7x:2x2x1
jax: 0.10.0
libtpu: 0.0.40
codegen_flags: <defaults>
</compile_context>

<pallas_src>
import functools

import jax
import jax.numpy as jnp
from jax.experimental import pallas as pl
from jax.experimental.pallas import tpu as pltpu


def _round_up(x: int, m: int) -> int:
    return (x + m - 1) // m * m


def mlp_kernel(x_ref, w1_ref, b1_ref, w2_ref, b2_ref, o_ref):
    # Fused hot path, all in VMEM:
    #   matmul (MXU, f32 acc) -> bias + ReLU (VPU, f32) -> matmul (MXU, f32 acc)
    #   -> bias (f32) -> store.
    h = jnp.dot(x_ref[...], w1_ref[...], preferred_element_type=jnp.float32)
    h = jnp.maximum(h + b1_ref[...], 0.0)                 # epilogue stays f32
    y = jnp.dot(h.astype(w2_ref.dtype), w2_ref[...],
                preferred_element_type=jnp.float32)
    o_ref[...] = (y + b2_ref[...]).astype(o_ref.dtype)


@functools.partial(jax.jit, static_argnames=("tb_max", "use_bf16"))
def single_layer_mlp(x, w1, b1, w2, b2, *, tb_max: int = 4096,
                     use_bf16: bool = False):
    """x: [B, n_input]; w1: [n_input, n_units]; w2: [n_units, n_out].

    Weights are stored pre-transposed ([in, out]) relative to nn.Linear's
    [out, in] so the kernel does plain row-major MXU matmuls.
    Returns the squeezed output, matching the PyTorch module.
    """
    B, n_input = x.shape
    n_units = w1.shape[1]
    n_out = w2.shape[1]
    out_dtype = x.dtype

    if use_bf16:
        # Halve the dominant HBM stream (x) and hit the MXU's native bf16 path
        # on v6e/v7x.  Biases and the elementwise epilogue stay f32.
        x = x.astype(jnp.bfloat16)
        w1 = w1.astype(jnp.bfloat16)
        w2 = w2.astype(jnp.bfloat16)

    x_bytes = jnp.dtype(x.dtype).itemsize
    w_bytes = jnp.dtype(w1.dtype).itemsize
    o_bytes = jnp.dtype(out_dtype).itemsize

    # --- batch tile: multiple of 8 sublanes, as large as tb_max allows -------
    TB = max(8, min(_round_up(tb_max, 8), _round_up(B, 8)))
    # Keep >=2 grid steps when B allows so the "parallel" grid axis actually
    # feeds both TensorCores on v7x (harmless on single-TC v5e/v6e).
    if B > 8 and pl.cdiv(B, TB) < 2:
        TB = max(8, _round_up(pl.cdiv(B, 2), 8))

    # Ragged final block is fine: OOB input rows are unspecified but rows are
    # independent, and OOB output rows are never written back.
    grid = (pl.cdiv(B, TB),)

    # --- explicit VMEM budget: ~3x need, hard-capped well below v7x's 64 MiB -
    weight_bytes = (n_input * n_units + n_units * n_out) * w_bytes \
        + (n_units + n_out) * 4
    tile_bytes = 2 * TB * (n_input * x_bytes + n_out * o_bytes)  # dbl-buffered
    interm_bytes = TB * n_units * 4                              # f32 h
    need = weight_bytes + tile_bytes + interm_bytes
    vmem_limit = int(min(max(3 * need, 16 << 20), 48 << 20))

    cost = pl.CostEstimate(
        flops=2 * B * (n_input * n_units + n_units * n_out),
        transcendentals=0,
        bytes_accessed=B * n_input * x_bytes + B * n_out * o_bytes
        + weight_bytes,
    )

    out = pl.pallas_call(
        mlp_kernel,
        out_shape=jax.ShapeDtypeStruct((B, n_out), out_dtype),
        grid=grid,
        in_specs=[
            # x: blocked along batch; new tile each grid step.
            pl.BlockSpec((TB, n_input), lambda i: (i, 0)),
            # weights / biases: constant block index -> fetched once, resident.
            pl.BlockSpec((n_input, n_units), lambda i: (0, 0)),
            pl.BlockSpec((1, n_units), lambda i: (0, 0)),
            pl.BlockSpec((n_units, n_out), lambda i: (0, 0)),
            pl.BlockSpec((1, n_out), lambda i: (0, 0)),
        ],
        out_specs=pl.BlockSpec((TB, n_out), lambda i: (i, 0)),
        compiler_params=pltpu.CompilerParams(
            dimension_semantics=("parallel",),   # shard batch across TCs (v7x)
            vmem_limit_bytes=vmem_limit,
        ),
        cost_estimate=cost,
    )(x, w1, b1, w2, b2)

    # .squeeze() semantics of the PyTorch module (removes size-1 dims).
    return jnp.squeeze(out)


def init_params(key, n_input, n_units, is_categorical):
    """Deterministic init mimicking nn.Linear's U(-1/sqrt(fan_in), +1/sqrt(fan_in))."""
    n_out = 2 if is_categorical else 1
    k1, k2, k3, k4 = jax.random.split(key, 4)
    bound1 = 1.0 / jnp.sqrt(n_input)
    bound2 = 1.0 / jnp.sqrt(n_units)
    # Stored pre-transposed: [in, out]
    w1 = jax.random.uniform(k1, (n_input, n_units), jnp.float32, -bound1, bound1)
    b1 = jax.random.uniform(k2, (1, n_units), jnp.float32, -bound1, bound1)
    w2 = jax.random.uniform(k3, (n_units, n_out), jnp.float32, -bound2, bound2)
    b2 = jax.random.uniform(k4, (1, n_out), jnp.float32, -bound2, bound2)
    return w1, b1, w2, b2


def _reference(x, w1, b1, w2, b2):
    return jnp.squeeze(jnp.maximum(x @ w1 + b1, 0.0) @ w2 + b2)


if __name__ == "__main__":
    key = jax.random.PRNGKey(0)
    kx, kp, kx2, kx3 = jax.random.split(key, 4)

    n_input = 32
    n_units = 64
    is_categorical = True  # -> output [batch, 2]

    w1, b1, w2, b2 = init_params(kp, n_input, n_units, is_categorical)

    # --- small sanity test (single grid step) ---
    batch = 8
    x = jax.random.normal(kx, (batch, n_input), jnp.float32)
    out = jax.block_until_ready(single_layer_mlp(x, w1, b1, w2, b2))
    ref = _reference(x, w1, b1, w2, b2)
    assert out.shape == ref.shape
    assert jnp.allclose(out, ref, atol=1e-5, rtol=1e-5)

    # --- multi-step grid + ragged final block (no jnp.pad path anymore) ---
    batch2 = 200   # TB becomes 104 -> grid=(2,), last block ragged
    x2 = jax.random.normal(kx2, (batch2, n_input), jnp.float32)
    out2 = jax.block_until_ready(single_layer_mlp(x2, w1, b1, w2, b2))
    ref2 = _reference(x2, w1, b1, w2, b2)
    assert out2.shape == ref2.shape
    assert jnp.allclose(out2, ref2, atol=1e-5, rtol=1e-5)

    # --- small ragged case: B not a multiple of the sublane tile ---
    batch3 = 13    # TB=8 -> grid=(2,), rows 13..15 of last block are OOB
    x3 = jax.random.normal(kx3, (batch3, n_input), jnp.float32)
    out3 = jax.block_until_ready(single_layer_mlp(x3, w1, b1, w2, b2))
    ref3 = _reference(x3, w1, b1, w2, b2)
    assert out3.shape == ref3.shape
    assert jnp.allclose(out3, ref3, atol=1e-5, rtol=1e-5)

    # --- bf16 operand path (f32 accumulation / epilogue), relaxed tolerance ---
    out_bf16 = jax.block_until_ready(
        single_layer_mlp(x2, w1, b1, w2, b2, use_bf16=True))
    assert out_bf16.shape == ref2.shape
    assert jnp.allclose(out_bf16, ref2, atol=5e-2, rtol=5e-2)

    print("KERNEL_OK")
</pallas_src>

<mosaic_0001>
module attributes {stable_mosaic.version = 11 : i64} {
  func.func @mlp_kernel(%arg0: i32, %arg1: memref<8x32xf32, #tpu.memory_space<vmem>>, %arg2: memref<32x64xf32, #tpu.memory_space<vmem>>, %arg3: memref<1x64xf32, #tpu.memory_space<vmem>>, %arg4: memref<64x2xf32, #tpu.memory_space<vmem>>, %arg5: memref<1x2xf32, #tpu.memory_space<vmem>>, %arg6: memref<8x2xf32, #tpu.memory_space<vmem>>) attributes {dimension_semantics = [#tpu.dimension_semantics<parallel>], iteration_bounds = array<i64: 1>, scalar_prefetch = 0 : i64, scratch_operands = 0 : i64, tpu.core_type = #tpu.core_type<tc>, window_params = [{transform_indices = @transform_0, window_bounds = array<i64: 8, 32>}, {pipeline_mode = #tpu.pipeline_mode<synchronous>, transform_indices = @transform_1, window_bounds = array<i64: 32, 64>}, {pipeline_mode = #tpu.pipeline_mode<synchronous>, transform_indices = @transform_2, window_bounds = array<i64: 1, 64>}, {pipeline_mode = #tpu.pipeline_mode<synchronous>, transform_indices = @transform_3, window_bounds = array<i64: 64, 2>}, {pipeline_mode = #tpu.pipeline_mode<synchronous>, transform_indices = @transform_4, window_bounds = array<i64: 1, 2>}, {transform_indices = @transform_5, window_bounds = array<i64: 8, 2>}]} {
    %c0 = arith.constant 0 : index
    %c0_0 = arith.constant 0 : index
    %0 = vector.load %arg1[%c0, %c0_0] : memref<8x32xf32, #tpu.memory_space<vmem>>, vector<8x32xf32>
    %c0_1 = arith.constant 0 : index
    %c0_2 = arith.constant 0 : index
    %1 = vector.load %arg2[%c0_1, %c0_2] : memref<32x64xf32, #tpu.memory_space<vmem>>, vector<32x64xf32>
    %cst = arith.constant dense<0.000000e+00> : vector<8x64xf32>
    %2 = tpu.matmul %0, %1, %cst {dimension_numbers = #tpu.dot_dimension_numbers<[1], [0], [0], [1], [0, 0, 1, 1], [], []>} : vector<8x32xf32>, vector<32x64xf32>, vector<8x64xf32> -> vector<8x64xf32>
    %c0_3 = arith.constant 0 : index
    %c0_4 = arith.constant 0 : index
    %3 = vector.load %arg3[%c0_3, %c0_4] : memref<1x64xf32, #tpu.memory_space<vmem>>, vector<1x64xf32>
    %4 = vector.broadcast %3 : vector<1x64xf32> to vector<8x64xf32>
    %5 = arith.addf %2, %4 : vector<8x64xf32>
    %cst_5 = arith.constant 0.000000e+00 : f32
    %6 = vector.broadcast %cst_5 : f32 to vector<8x64xf32>
    %7 = arith.maximumf %5, %6 : vector<8x64xf32>
    %c0_6 = arith.constant 0 : index
    %c0_7 = arith.constant 0 : index
    %8 = vector.load %arg4[%c0_6, %c0_7] : memref<64x2xf32, #tpu.memory_space<vmem>>, vector<64x2xf32>
    %cst_8 = arith.constant dense<0.000000e+00> : vector<8x2xf32>
    %9 = tpu.matmul %7, %8, %cst_8 {dimension_numbers = #tpu.dot_dimension_numbers<[1], [0], [0], [1], [0, 0, 1, 1], [], []>} : vector<8x64xf32>, vector<64x2xf32>, vector<8x2xf32> -> vector<8x2xf32>
    %c0_9 = arith.constant 0 : index
    %c0_10 = arith.constant 0 : index
    %10 = vector.load %arg5[%c0_9, %c0_10] : memref<1x2xf32, #tpu.memory_space<vmem>>, vector<1x2xf32>
    %11 = vector.broadcast %10 : vector<1x2xf32> to vector<8x2xf32>
    %12 = arith.addf %9, %11 : vector<8x2xf32>
    %c0_11 = arith.constant 0 : index
    %c0_12 = arith.constant 0 : index
    %13 = vector.load %arg6[%c0_11, %c0_12] : memref<8x2xf32, #tpu.memory_space<vmem>>, vector<8x2xf32>
    tpu.vector_store %arg6[%c0_11, %c0_12], %12 {strides = array<i32>} : memref<8x2xf32, #tpu.memory_space<vmem>>, vector<8x2xf32>,
    return
  }
  func.func @transform_0(%arg0: i32) -> (i32, i32) {
    %c0_i32 = arith.constant 0 : i32
    %c0_i32_0 = arith.constant 0 : i32
    return %arg0, %c0_i32 : i32, i32
  }
  func.func @transform_1(%arg0: i32) -> (i32, i32) {
    %c0_i32 = arith.constant 0 : i32
    %c0_i32_0 = arith.constant 0 : i32
    %c0_i32_1 = arith.constant 0 : i32
    return %c0_i32, %c0_i32_0 : i32, i32
  }
  func.func @transform_2(%arg0: i32) -> (i32, i32) {
    %c0_i32 = arith.constant 0 : i32
    %c0_i32_0 = arith.constant 0 : i32
    %c0_i32_1 = arith.constant 0 : i32
    return %c0_i32, %c0_i32_0 : i32, i32
  }
  func.func @transform_3(%arg0: i32) -> (i32, i32) {
    %c0_i32 = arith.constant 0 : i32
    %c0_i32_0 = arith.constant 0 : i32
    %c0_i32_1 = arith.constant 0 : i32
    return %c0_i32, %c0_i32_0 : i32, i32
  }
  func.func @transform_4(%arg0: i32) -> (i32, i32) {
    %c0_i32 = arith.constant 0 : i32
    %c0_i32_0 = arith.constant 0 : i32
    %c0_i32_1 = arith.constant 0 : i32
    return %c0_i32, %c0_i32_0 : i32, i32
  }
  func.func @transform_5(%arg0: i32) -> (i32, i32) {
    %c0_i32 = arith.constant 0 : i32
    %c0_i32_0 = arith.constant 0 : i32
    return %arg0, %c0_i32 : i32, i32
  }
}

</mosaic_0001>

<llo_original>
// kernel: single_layer_mlp.1
$region0: #{single_layer_mlp.1}
  #allocation0 [shape = 'u32[]', space=smem, size = 0x4, offset = 0x4, fixed_abs, tag = 'smem constant byte address 0x4 - core index']
  #allocation1 [shape = 'u32[144,128]{1,0:T(1,128)}', space=vmem, size = 0x12000, scoped, tag = 'internal scratch']
  %s0 = inlined_call_operand.vmem [shape: f32[8,32], index: 0, kind: input, shape index: {}]
  %s1 = inlined_call_operand.vmem [shape: f32[32,64], index: 1, kind: input, shape index: {}]
  %s2 = inlined_call_operand.vmem [shape: f32[1,64], index: 2, kind: input, shape index: {}]
  %s3 = inlined_call_operand.vmem [shape: f32[64,2], index: 3, kind: input, shape index: {}]
  %s4 = inlined_call_operand.vmem [shape: f32[1,2], index: 4, kind: input, shape index: {}]
  %s5 = inlined_call_operand.vmem [shape: f32[8,2], index: 5, kind: output, shape index: {}]
  %s6 = sld [smem:[#allocation0]]
  $region30: #{single_layer_mlp.1} parent=0
    _
  %s8 = ssub.s32 1, %s6
  %s9 = scalar_select 0, %s8, %s6
  // Predicated region
  $region2: #{single_layer_mlp.1} parent=0 // pred_check
    _
  $region3: #{single_layer_mlp.1} parent=0 // pred_check_branch
    %11 = sbr.rel (0) target = $region5
  $region4: #{single_layer_mlp.1} parent=0 // pred_region
    _
  $region5: #{single_layer_mlp.1} parent=0 // pred_fallthru
    _
  // Predicated region
  $region6: #{single_layer_mlp.1} parent=0 // pred_check
    _
  $region7: #{single_layer_mlp.1} parent=0 // pred_check_branch
    %13 = sbr.rel (0) target = $region9
  $region8: #{single_layer_mlp.1} parent=0 // pred_region
    _
  $region9: #{single_layer_mlp.1} parent=0 // pred_fallthru
    _
  // Predicated region
  $region10: #{single_layer_mlp.1} parent=0 // pred_check
    _
  $region11: #{single_layer_mlp.1} parent=0 // pred_check_branch
    %15 = sbr.rel (0) target = $region13
  $region12: #{single_layer_mlp.1} parent=0 // pred_region
    _
  $region13: #{single_layer_mlp.1} parent=0 // pred_fallthru
    _
  // Predicated region
  $region14: #{single_layer_mlp.1} parent=0 // pred_check
    _
  $region15: #{single_layer_mlp.1} parent=0 // pred_check_branch
    %17 = sbr.rel (0) target = $region17
  $region16: #{single_layer_mlp.1} parent=0 // pred_region
    _
  $region17: #{single_layer_mlp.1} parent=0 // pred_fallthru
    _
  // Predicated region
  $region18: #{single_layer_mlp.1} parent=0 // pred_check
    _
  $region19: #{single_layer_mlp.1} parent=0 // pred_check_branch
    %19 = sbr.rel (0) target = $region21
  $region20: #{single_layer_mlp.1} parent=0 // pred_region
    _
  $region21: #{single_layer_mlp.1} parent=0 // pred_fallthru
    _
  %v20 = vld [vmem:[%s0] sm:$0xff]
  %v21 = vld [vmem:[%s1] sm:$0xff]
  %v22 = vld [vmem:[%s1 + $0x8] sm:$0xff]
  %v23 = vld [vmem:[%s1 + $0x10] sm:$0xff]
  %v24 = vld [vmem:[%s1 + $0x18] sm:$0xff]
  %v25 = vld [vmem:[%s2] sm:$0x1]
  %v27 = vlaneseq
  %v28 = vshrl.u32 %v27, 7
  %v29 = vsub.s32 0, %v28
  %v30 = vrot.slane %v25, %v29
  %vm32 = vcmask 261120
  %v34 = vsel %vm32, %v20, 0
  %36 = vmatprep.subr.mxu0 0.0
  %37 = vmatpush1.msra.mxu0 %v21
  %38 = vmatprep.subr.mxu0 0.0
  %39 = vmatpush1.msra.mxu0 %v22
  %40 = vmatprep.subr.mxu0 0.0
  %41 = vmatpush1.msra.mxu0 %v23
  %42 = vmatprep.subr.mxu0 0.0
  %43 = vmatpush1.msra.mxu0 %v24
  %44 = vmatprep.subr.mxu0 0.0
  %45 = vmatpush1.msra.mxu0 0.0
  %46 = vmatprep.subr.mxu0 0.0
  %47 = vmatpush1.msra.mxu0 0.0
  %48 = vmatprep.subr.mxu0 0.0
  %49 = vmatpush1.msra.mxu0 0.0
  %50 = vmatprep.subr.mxu0 0.0
  %51 = vmatpush1.msra.mxu0 0.0
  %52 = vmatprep.subr.mxu0 0.0
  %53 = vmatpush1.msra.mxu0 0.0
  %54 = vmatprep.subr.mxu0 0.0
  %55 = vmatpush1.msra.mxu0 0.0
  %56 = vmatprep.subr.mxu0 0.0
  %57 = vmatpush1.msra.mxu0 0.0
  %58 = vmatprep.subr.mxu0 0.0
  %59 = vmatpush1.msra.mxu0 0.0
  %60 = vmatprep.subr.mxu0 0.0
  %61 = vmatpush1.msra.mxu0 0.0
  %62 = vmatprep.subr.mxu0 0.0
  %63 = vmatpush1.msra.mxu0 0.0
  %64 = vmatprep.subr.mxu0 0.0
  %65 = vmatpush1.msra.mxu0 0.0
  %66 = vmatprep.subr.mxu0 0.0
  %67 = vmatpush1.msra.mxu0 0.0
  %68 = vmatprep.subr.mxu0 0.0
  %69 = vmatpush1.msra.mxu0 0.0
  %70 = vmatprep.subr.mxu0 0.0
  %71 = vmatpush1.msra.mxu0 0.0
  %72 = vmatprep.subr.mxu0 0.0
  %73 = vmatpush1.msra.mxu0 0.0
  %74 = vmatprep.subr.mxu0 0.0
  %75 = vmatpush1.msra.mxu0 0.0
  %76 = vmatprep.subr.mxu0 0.0
  %77 = vmatpush1.msra.mxu0 0.0
  %78 = vmatprep.subr.mxu0 0.0
  %79 = vmatpush1.msra.mxu0 0.0
  %80 = vmatprep.subr.mxu0 0.0
  %81 = vmatpush1.msra.mxu0 0.0
  %82 = vmatprep.subr.mxu0 0.0
  %83 = vmatpush1.msra.mxu0 0.0
  %84 = vmatprep.subr.mxu0 0.0
  %85 = vmatpush1.msra.mxu0 0.0
  %86 = vmatprep.subr.mxu0 0.0
  %87 = vmatpush1.msra.mxu0 0.0
  %88 = vmatprep.subr.mxu0 0.0
  %89 = vmatpush1.msra.mxu0 0.0
  %90 = vmatprep.subr.mxu0 0.0
  %91 = vmatpush1.msra.mxu0 0.0
  %92 = vmatprep.subr.mxu0 0.0
  %93 = vmatpush1.msra.mxu0 0.0
  %94 = vmatprep.subr.mxu0 0.0
  %95 = vmatpush1.msra.mxu0 0.0
  %96 = vmatprep.subr.mxu0 0.0
  %97 = vmatpush1.msra.mxu0 0.0
  %98 = vmatprep.subr.mxu0 0.0
  %99 = vmatpush1.msra.mxu0 0.0
  %100 = vmatprep.mubr.f32.mxu0 0.0
  %101 = vmatmul.mubr.f32.gmra.mrb[0].mxu0 %v34
  %v102 = vpop.f32.mrb[0].mxu0
  %v103 = vadd.f32 %v30, %v102
  %v104 = vpop.f32.mrb[0].mxu0
  %105 = vdwg.mxu0
  %v106 = vmax.f32 %v103, 0.0
  %v107 = vld [vmem:[%s3] sm:$0xff]
  %v108 = vld [vmem:[%s3 + $0x8] sm:$0xff]
  %v109 = vld [vmem:[%s3 + $0x10] sm:$0xff]
  %v110 = vld [vmem:[%s3 + $0x18] sm:$0xff]
  %v111 = vld [vmem:[%s3 + $0x20] sm:$0xff]
  %v112 = vld [vmem:[%s3 + $0x28] sm:$0xff]
  %v113 = vld [vmem:[%s3 + $0x30] sm:$0xff]
  %v114 = vld [vmem:[%s3 + $0x38] sm:$0xff]
  %v115 = vld [vmem:[%s4] sm:$0x1]
  %v117 = vlaneseq
  %v118 = vshrl.u32 %v117, 7
  %v119 = vsub.s32 0, %v118
  %v120 = vrot.slane %v115, %v119
  %vm122 = vcmask 523264
  %v124 = vsel %vm122, %v106, 0
  %126 = vmatprep.subr.mxu0 0.0
  %127 = vmatpush1.msra.mxu0 %v107
  %128 = vmatprep.subr.mxu0 0.0
  %129 = vmatpush1.msra.mxu0 %v108
  %130 = vmatprep.subr.mxu0 0.0
  %131 = vmatpush1.msra.mxu0 %v109
  %132 = vmatprep.subr.mxu0 0.0
  %133 = vmatpush1.msra.mxu0 %v110
  %134 = vmatprep.subr.mxu0 0.0
  %135 = vmatpush1.msra.mxu0 %v111
  %136 = vmatprep.subr.mxu0 0.0
  %137 = vmatpush1.msra.mxu0 %v112
  %138 = vmatprep.subr.mxu0 0.0
  %139 = vmatpush1.msra.mxu0 %v113
  %140 = vmatprep.subr.mxu0 0.0
  %141 = vmatpush1.msra.mxu0 %v114
  %142 = vmatprep.subr.mxu0 0.0
  %143 = vmatpush1.msra.mxu0 0.0
  %144 = vmatprep.subr.mxu0 0.0
  %145 = vmatpush1.msra.mxu0 0.0
  %146 = vmatprep.subr.mxu0 0.0
  %147 = vmatpush1.msra.mxu0 0.0
  %148 = vmatprep.subr.mxu0 0.0
  %149 = vmatpush1.msra.mxu0 0.0
  %150 = vmatprep.subr.mxu0 0.0
  %151 = vmatpush1.msra.mxu0 0.0
  %152 = vmatprep.subr.mxu0 0.0
  %153 = vmatpush1.msra.mxu0 0.0
  %154 = vmatprep.subr.mxu0 0.0
  %155 = vmatpush1.msra.mxu0 0.0
  %156 = vmatprep.subr.mxu0 0.0
  %157 = vmatpush1.msra.mxu0 0.0
  %158 = vmatprep.subr.mxu0 0.0
  %159 = vmatpush1.msra.mxu0 0.0
  %160 = vmatprep.subr.mxu0 0.0
  %161 = vmatpush1.msra.mxu0 0.0
  %162 = vmatprep.subr.mxu0 0.0
  %163 = vmatpush1.msra.mxu0 0.0
  %164 = vmatprep.subr.mxu0 0.0
  %165 = vmatpush1.msra.mxu0 0.0
  %166 = vmatprep.subr.mxu0 0.0
  %167 = vmatpush1.msra.mxu0 0.0
  %168 = vmatprep.subr.mxu0 0.0
  %169 = vmatpush1.msra.mxu0 0.0
  %170 = vmatprep.subr.mxu0 0.0
  %171 = vmatpush1.msra.mxu0 0.0
  %172 = vmatprep.subr.mxu0 0.0
  %173 = vmatpush1.msra.mxu0 0.0
  %174 = vmatprep.subr.mxu0 0.0
  %175 = vmatpush1.msra.mxu0 0.0
  %176 = vmatprep.subr.mxu0 0.0
  %177 = vmatpush1.msra.mxu0 0.0
  %178 = vmatprep.subr.mxu0 0.0
  %179 = vmatpush1.msra.mxu0 0.0
  %180 = vmatprep.subr.mxu0 0.0
  %181 = vmatpush1.msra.mxu0 0.0
  %182 = vmatprep.subr.mxu0 0.0
  %183 = vmatpush1.msra.mxu0 0.0
  %184 = vmatprep.subr.mxu0 0.0
  %185 = vmatpush1.msra.mxu0 0.0
  %186 = vmatprep.subr.mxu0 0.0
  %187 = vmatpush1.msra.mxu0 0.0
  %188 = vmatprep.subr.mxu0 0.0
  %189 = vmatpush1.msra.mxu0 0.0
  %190 = vmatprep.mubr.f32.mxu0 0.0
  %191 = vmatmul.mubr.f32.gmra.mrb[0].mxu0 %v124
  %v192 = vpop.f32.mrb[0].mxu0
  %v193 = vadd.f32 %v120, %v192
  %v194 = vpop.f32.mrb[0].mxu0
  %195 = vdwg.mxu0
  %vm196 = vcmask 15360
  %197 = vst.msk [vmem:[%s5] sm:$0xff] %vm196, %v193
  // Predicated region
  $region22: #{single_layer_mlp.1} parent=0 // pred_check
    _
  $region23: #{single_layer_mlp.1} parent=0 // pred_check_branch
    %199 = sbr.rel (0) target = $region25
  $region24: #{single_layer_mlp.1} parent=0 // pred_region
    _
  $region25: #{single_layer_mlp.1} parent=0 // pred_fallthru
    _
  // Predicated region
  $region26: #{single_layer_mlp.1} parent=0 // pred_check
    _
  $region27: #{single_layer_mlp.1} parent=0 // pred_check_branch
    %201 = sbr.rel (0) target = $region29
  $region28: #{single_layer_mlp.1} parent=0 // pred_region
    _
  $region29: #{single_layer_mlp.1} parent=0 // pred_fallthru
    _

</llo_original>
